<compile_context>
chip_gen: v6e
topology: v6e:2x2x1
jax: 0.10.0
libtpu: 0.0.40
codegen_flags: <defaults>
</compile_context>

<pallas_src>
import functools

import jax
import jax.numpy as jnp
from jax.experimental import pallas as pl
from jax.experimental.pallas import tpu as pltpu

_VMEM_TILE_BUDGET = 16 * 1024 * 1024   # bytes earmarked for pipelined tiles + temps
_VMEM_LIMIT_BYTES = 32 * 1024 * 1024   # conservative; fits v7x (64 MiB physical VMEM)


def _pick_block_rows(batch, num_classes, in_dtype, block_rows):
    """Largest row tile keeping 2x double-buffered inputs + f32 temps in budget."""
    if block_rows is None:
        in_bytes = jnp.dtype(in_dtype).itemsize
        # 2 inputs x 2 pipeline buffers (input dtype) + ~6 (TB, C) f32 temporaries.
        per_row = num_classes * (2 * 2 * in_bytes + 6 * 4)
        block_rows = max(8, min(2048, _VMEM_TILE_BUDGET // per_row))
    if block_rows >= batch:
        return batch                        # single full-height block (always legal)
    return max(8, (block_rows // 8) * 8)    # sublane-aligned tile


def _confidence_ce_tile_kernel(weak_ref, strong_ref, ce_acc_ref, cnt_acc_ref, *,
                               threshold, batch, block_rows, tiles_per_split):
    c = pl.program_id(0)          # core-split axis ("parallel")
    t = pl.program_id(1)          # row-tile reduction axis ("arbitrary")

    @pl.when(t == 0)
    def _init():
        ce_acc_ref[...] = jnp.zeros_like(ce_acc_ref)
        cnt_acc_ref[...] = jnp.zeros_like(cnt_acc_ref)

    weak = weak_ref[...].astype(jnp.float32)      # (TB, C)
    strong = strong_ref[...].astype(jnp.float32)  # (TB, C)
    tb, num_classes = weak.shape

    # Row validity from the UNCLAMPED tile id: clamped duplicate tiles and
    # boundary-padding rows are fully masked out of the accumulation.
    tile_id = c * tiles_per_split + t
    row = jax.lax.broadcasted_iota(jnp.int32, (tb, 1), 0)
    valid = (tile_id * block_rows + row) < batch              # (TB, 1)

    col = jax.lax.broadcasted_iota(jnp.int32, (tb, num_classes), 1)

    # argmax of weak logits == argmax of softmax(weak); first index on ties
    # (torch.max semantics).
    wmax = jnp.max(weak, axis=1, keepdims=True)
    target = jnp.min(jnp.where(weak >= wmax, col, num_classes),
                     axis=1, keepdims=True)                   # (TB, 1)
    onehot = col == target                                    # (TB, C)

    # max softmax prob > threshold  <=>  sum(exp(weak - wmax)) < 1/threshold
    inv_thr = (1.0 / threshold) if threshold > 0.0 else float("inf")
    sumexp_w = jnp.sum(jnp.exp(weak - wmax), axis=1, keepdims=True)
    confident = sumexp_w < inv_thr                            # (TB, 1)

    mask = jnp.logical_and(confident, valid)                  # (TB, 1)

    # Cross entropy of strong logits at target, without materializing log-probs:
    # ce = logsumexp(strong) - strong[target]  (shifted by smax for stability).
    smax = jnp.max(strong, axis=1, keepdims=True)
    sh = strong - smax
    lse = jnp.log(jnp.sum(jnp.exp(sh), axis=1, keepdims=True))
    picked = jnp.sum(jnp.where(onehot, sh, 0.0), axis=1, keepdims=True)
    ce = lse - picked                                         # (TB, 1)

    # Per-class masked accumulation. jnp.where (not multiply-by-mask) keeps any
    # NaN/Inf coming from padded garbage rows out of the sums.
    sel = jnp.logical_and(onehot, mask)                       # (TB, C)
    cnt_contrib = jnp.sum(sel.astype(jnp.float32), axis=0, keepdims=True)  # (1, C)
    ce_contrib = jnp.sum(jnp.where(sel, ce, 0.0), axis=0, keepdims=True)   # (1, C)

    ce_acc_ref[...] += ce_contrib[None]                       # (1, 1, C)
    cnt_acc_ref[...] += cnt_contrib[None]


@functools.partial(
    jax.jit,
    static_argnames=("threshold", "apply_class_balancing", "block_rows"))
def confidence_based_ce(anchors_weak, anchors_strong, *, threshold,
                        apply_class_balancing, block_rows=None):
    batch, num_classes = anchors_weak.shape
    assert anchors_strong.shape == (batch, num_classes)

    tb = _pick_block_rows(batch, num_classes, anchors_weak.dtype, block_rows)
    num_tiles = pl.cdiv(batch, tb)
    num_splits = 2 if num_tiles > 1 else 1       # 2 TCs on v7x; harmless elsewhere
    tiles_per_split = pl.cdiv(num_tiles, num_splits)

    def in_map(c, t):
        # Clamp so over-hanging iterations never DMA out of bounds; the kernel
        # masks their rows out via the unclamped tile id.
        return (jnp.minimum(c * tiles_per_split + t, num_tiles - 1), 0)

    def out_map(c, t):
        return (c, 0, 0)

    kernel = functools.partial(
        _confidence_ce_tile_kernel,
        threshold=float(threshold),
        batch=batch,
        block_rows=tb,
        tiles_per_split=tiles_per_split,
    )

    ce_parts, cnt_parts = pl.pallas_call(
        kernel,
        out_shape=(
            jax.ShapeDtypeStruct((num_splits, 1, num_classes), jnp.float32),
            jax.ShapeDtypeStruct((num_splits, 1, num_classes), jnp.float32),
        ),
        grid_spec=pltpu.PrefetchScalarGridSpec(
            num_scalar_prefetch=0,
            grid=(num_splits, tiles_per_split),
            in_specs=[
                pl.BlockSpec((tb, num_classes), in_map),
                pl.BlockSpec((tb, num_classes), in_map),
            ],
            out_specs=(
                pl.BlockSpec((1, 1, num_classes), out_map),
                pl.BlockSpec((1, 1, num_classes), out_map),
            ),
        ),
        compiler_params=pltpu.CompilerParams(
            dimension_semantics=("parallel", "arbitrary"),
            vmem_limit_bytes=_VMEM_LIMIT_BYTES,
        ),
    )(anchors_weak, anchors_strong)

    # O(C) epilogue (sanctioned by the review): fold class-balancing weights
    # n/count and the weighted-mean normalization of F.cross_entropy into the
    # per-class sums produced by the kernel.
    ce_sums = jnp.sum(ce_parts[:, 0, :], axis=0)      # (C,)
    counts = jnp.sum(cnt_parts[:, 0, :], axis=0)      # (C,)
    n = jnp.sum(counts)
    if apply_class_balancing:
        present = counts > 0.0
        num = n * jnp.sum(jnp.where(present,
                                    ce_sums / jnp.maximum(counts, 1.0), 0.0))
        den = n * jnp.sum(present.astype(jnp.float32))
    else:
        num = jnp.sum(ce_sums)
        den = n
    safe_den = jnp.where(den > 0.0, den, 1.0)
    return jnp.where(den > 0.0, num / safe_den, 0.0)  # mask all-zero -> 0


def _reference(weak, strong, threshold, apply_class_balancing):
    """Pure-JAX reference mirroring the PyTorch module."""
    weak = weak.astype(jnp.float32)
    strong = strong.astype(jnp.float32)
    probs = jax.nn.softmax(weak, axis=1)
    max_prob = probs.max(axis=1)
    target = probs.argmax(axis=1)
    mask = (max_prob > threshold).astype(jnp.float32)
    n = mask.sum()
    logp = jax.nn.log_softmax(strong, axis=1)
    ce = -jnp.take_along_axis(logp, target[:, None], axis=1)[:, 0]
    if apply_class_balancing:
        counts = jnp.zeros((weak.shape[1],), jnp.float32).at[target].add(mask)
        cnt_row = counts[target]
        w = jnp.where(cnt_row > 0, n / jnp.maximum(cnt_row, 1.0), 1.0)
    else:
        w = jnp.ones_like(ce)
    num = jnp.sum(mask * w * ce)
    den = jnp.sum(mask * w)
    return jnp.where(den > 0, num / jnp.where(den > 0, den, 1.0), 0.0)


if __name__ == "__main__":
    key = jax.random.PRNGKey(0)
    k0, k1, k2, k3 = jax.random.split(key, 4)

    # Case 1: multi-tile streaming + 2-way split, class balancing on.
    B, C = 32, 8
    weak = 2.5 * jax.random.normal(k0, (B, C), dtype=jnp.float32)
    strong = jax.random.normal(k1, (B, C), dtype=jnp.float32)
    loss = confidence_based_ce(weak, strong, threshold=0.5,
                               apply_class_balancing=True, block_rows=8)
    loss = jax.block_until_ready(loss)
    ref = _reference(weak, strong, 0.5, True)
    assert jnp.allclose(loss, ref, atol=1e-5, rtol=1e-5), (loss, ref)

    # Case 2: ragged batch (B % block_rows != 0, odd tile count), no balancing.
    B2, C2 = 23, 16
    weak2 = 2.0 * jax.random.normal(k2, (B2, C2), dtype=jnp.float32)
    strong2 = jax.random.normal(k3, (B2, C2), dtype=jnp.float32)
    loss2 = confidence_based_ce(weak2, strong2, threshold=0.4,
                                apply_class_balancing=False, block_rows=8)
    loss2 = jax.block_until_ready(loss2)
    ref2 = _reference(weak2, strong2, 0.4, False)
    assert jnp.allclose(loss2, ref2, atol=1e-5, rtol=1e-5), (loss2, ref2)

    # Case 3: empty mask -> loss must be exactly 0.
    loss3 = confidence_based_ce(weak, strong, threshold=1.0,
                                apply_class_balancing=True, block_rows=8)
    loss3 = jax.block_until_ready(loss3)
    assert jnp.allclose(loss3, 0.0), loss3

    print("KERNEL_OK")
</pallas_src>

<mosaic_0001>
module attributes {stable_mosaic.version = 11 : i64} {
  func.func @_confidence_ce_tile_kernel(%arg0: i32, %arg1: i32, %arg2: memref<8x8xf32, #tpu.memory_space<vmem>>, %arg3: memref<8x8xf32, #tpu.memory_space<vmem>>, %arg4: memref<1x1x8xf32, #tpu.memory_space<vmem>>, %arg5: memref<1x1x8xf32, #tpu.memory_space<vmem>>) attributes {dimension_semantics = [#tpu.dimension_semantics<parallel>, #tpu.dimension_semantics<arbitrary>], iteration_bounds = array<i64: 2, 2>, scalar_prefetch = 0 : i64, scratch_operands = 0 : i64, tpu.core_type = #tpu.core_type<tc>, window_params = [{transform_indices = @transform_0, window_bounds = array<i64: 8, 8>}, {transform_indices = @transform_1, window_bounds = array<i64: 8, 8>}, {transform_indices = @transform_2, window_bounds = array<i64: 1, 1, 8>}, {transform_indices = @transform_3, window_bounds = array<i64: 1, 1, 8>}]} {
    %c0_i32 = arith.constant 0 : i32
    %0 = arith.cmpi eq, %arg1, %c0_i32 : i32
    %1 = arith.extui %0 : i1 to i32
    %c0_i32_0 = arith.constant 0 : i32
    %2 = arith.cmpi ne, %1, %c0_i32_0 : i32
    scf.if %2 {
      %cst_27 = arith.constant 0.000000e+00 : f32
      %65 = vector.broadcast %cst_27 : f32 to vector<1x1x8xf32>
      %c0_28 = arith.constant 0 : index
      %c0_29 = arith.constant 0 : index
      %c0_30 = arith.constant 0 : index
      %66 = vector.load %arg4[%c0_28, %c0_29, %c0_30] : memref<1x1x8xf32, #tpu.memory_space<vmem>>, vector<1x1x8xf32>
      tpu.vector_store %arg4[%c0_28, %c0_29, %c0_30], %65 {strides = array<i32>} : memref<1x1x8xf32, #tpu.memory_space<vmem>>, vector<1x1x8xf32>,
      %cst_31 = arith.constant 0.000000e+00 : f32
      %67 = vector.broadcast %cst_31 : f32 to vector<1x1x8xf32>
      %c0_32 = arith.constant 0 : index
      %c0_33 = arith.constant 0 : index
      %c0_34 = arith.constant 0 : index
      %68 = vector.load %arg5[%c0_32, %c0_33, %c0_34] : memref<1x1x8xf32, #tpu.memory_space<vmem>>, vector<1x1x8xf32>
      tpu.vector_store %arg5[%c0_32, %c0_33, %c0_34], %67 {strides = array<i32>} : memref<1x1x8xf32, #tpu.memory_space<vmem>>, vector<1x1x8xf32>,
    } else {
    }
    %c0 = arith.constant 0 : index
    %c0_1 = arith.constant 0 : index
    %3 = vector.load %arg2[%c0, %c0_1] : memref<8x8xf32, #tpu.memory_space<vmem>>, vector<8x8xf32>
    %c0_2 = arith.constant 0 : index
    %c0_3 = arith.constant 0 : index
    %4 = vector.load %arg3[%c0_2, %c0_3] : memref<8x8xf32, #tpu.memory_space<vmem>>, vector<8x8xf32>
    %c2_i32 = arith.constant 2 : i32
    %5 = arith.muli %arg0, %c2_i32 : i32
    %6 = arith.addi %5, %arg1 : i32
    %7 = tpu.iota {dimensions = array<i32: 0>} : vector<8x1xi32>
    %c8_i32 = arith.constant 8 : i32
    %8 = arith.muli %6, %c8_i32 : i32
    %9 = vector.broadcast %8 : i32 to vector<8x1xi32>
    %10 = arith.addi %9, %7 : vector<8x1xi32>
    %c32_i32 = arith.constant 32 : i32
    %11 = vector.broadcast %c32_i32 : i32 to vector<8x1xi32>
    %12 = arith.cmpi slt, %10, %11 : vector<8x1xi32>
    %13 = tpu.iota {dimensions = array<i32: 1>} : vector<8x8xi32>
    %cst = arith.constant dense<0xFF800000> : vector<8xf32>
    %14 = vector.multi_reduction <maximumf>, %3, %cst [1] : vector<8x8xf32> to vector<8xf32>
    %15 = vector.shape_cast %14 : vector<8xf32> to vector<8x1xf32>
    %16 = vector.broadcast %15 : vector<8x1xf32> to vector<8x8xf32>
    %17 = arith.cmpf oge, %3, %16 : vector<8x8xf32>
    %c8_i32_4 = arith.constant 8 : i32
    %18 = vector.broadcast %c8_i32_4 : i32 to vector<8x8xi32>
    %19 = arith.select %17, %13, %18 : vector<8x8xi1>, vector<8x8xi32>
    %cst_5 = arith.constant dense<2147483647> : vector<8xi32>
    %20 = vector.multi_reduction <minsi>, %19, %cst_5 [1] : vector<8x8xi32> to vector<8xi32>
    %21 = vector.shape_cast %20 : vector<8xi32> to vector<8x1xi32>
    %22 = vector.broadcast %21 : vector<8x1xi32> to vector<8x8xi32>
    %23 = arith.cmpi eq, %13, %22 : vector<8x8xi32>
    %24 = vector.broadcast %15 : vector<8x1xf32> to vector<8x8xf32>
    %25 = arith.subf %3, %24 : vector<8x8xf32>
    %26 = math.exp %25 : vector<8x8xf32>
    %cst_6 = arith.constant dense<0.000000e+00> : vector<8xf32>
    %27 = vector.multi_reduction <add>, %26, %cst_6 [1] : vector<8x8xf32> to vector<8xf32>
    %28 = vector.shape_cast %27 : vector<8xf32> to vector<8x1xf32>
    %cst_7 = arith.constant 2.000000e+00 : f32
    %29 = vector.broadcast %cst_7 : f32 to vector<8x1xf32>
    %30 = arith.cmpf olt, %28, %29 : vector<8x1xf32>
    %31 = arith.andi %30, %12 : vector<8x1xi1>
    %cst_8 = arith.constant dense<0xFF800000> : vector<8xf32>
    %32 = vector.multi_reduction <maximumf>, %4, %cst_8 [1] : vector<8x8xf32> to vector<8xf32>
    %33 = vector.shape_cast %32 : vector<8xf32> to vector<8x1xf32>
    %34 = vector.broadcast %33 : vector<8x1xf32> to vector<8x8xf32>
    %35 = arith.subf %4, %34 : vector<8x8xf32>
    %36 = math.exp %35 : vector<8x8xf32>
    %cst_9 = arith.constant dense<0.000000e+00> : vector<8xf32>
    %37 = vector.multi_reduction <add>, %36, %cst_9 [1] : vector<8x8xf32> to vector<8xf32>
    %38 = vector.shape_cast %37 : vector<8xf32> to vector<8x1xf32>
    %39 = math.log %38 : vector<8x1xf32>
    %cst_10 = arith.constant 0.000000e+00 : f32
    %40 = vector.broadcast %cst_10 : f32 to vector<8x8xf32>
    %41 = arith.select %23, %35, %40 : vector<8x8xi1>, vector<8x8xf32>
    %cst_11 = arith.constant dense<0.000000e+00> : vector<8xf32>
    %42 = vector.multi_reduction <add>, %41, %cst_11 [1] : vector<8x8xf32> to vector<8xf32>
    %43 = vector.shape_cast %42 : vector<8xf32> to vector<8x1xf32>
    %44 = arith.subf %39, %43 : vector<8x1xf32>
    %45 = vector.broadcast %31 : vector<8x1xi1> to vector<8x8xi1>
    %46 = arith.andi %23, %45 : vector<8x8xi1>
    %47 = arith.extui %46 : vector<8x8xi1> to vector<8x8xi32>
    %48 = arith.sitofp %47 : vector<8x8xi32> to vector<8x8xf32>
    %cst_12 = arith.constant dense<0.000000e+00> : vector<8xf32>
    %49 = vector.multi_reduction <add>, %48, %cst_12 [0] : vector<8x8xf32> to vector<8xf32>
    %50 = vector.shape_cast %49 : vector<8xf32> to vector<1x8xf32>
    %cst_13 = arith.constant 0.000000e+00 : f32
    %51 = vector.shape_cast %44 : vector<8x1xf32> to vector<8x1xf32>
    %52 = vector.broadcast %51 : vector<8x1xf32> to vector<8x8xf32>
    %53 = vector.broadcast %cst_13 : f32 to vector<8x8xf32>
    %54 = arith.select %46, %52, %53 : vector<8x8xi1>, vector<8x8xf32>
    %cst_14 = arith.constant dense<0.000000e+00> : vector<8xf32>
    %55 = vector.multi_reduction <add>, %54, %cst_14 [0] : vector<8x8xf32> to vector<8xf32>
    %56 = vector.shape_cast %55 : vector<8xf32> to vector<1x8xf32>
    %c0_15 = arith.constant 0 : index
    %c0_16 = arith.constant 0 : index
    %c0_17 = arith.constant 0 : index
    %57 = vector.load %arg4[%c0_15, %c0_16, %c0_17] : memref<1x1x8xf32, #tpu.memory_space<vmem>>, vector<1x1x8xf32>
    %58 = vector.shape_cast %56 : vector<1x8xf32> to vector<1x1x8xf32>
    %59 = arith.addf %57, %58 : vector<1x1x8xf32>
    %c0_18 = arith.constant 0 : index
    %c0_19 = arith.constant 0 : index
    %c0_20 = arith.constant 0 : index
    %60 = vector.load %arg4[%c0_18, %c0_19, %c0_20] : memref<1x1x8xf32, #tpu.memory_space<vmem>>, vector<1x1x8xf32>
    tpu.vector_store %arg4[%c0_18, %c0_19, %c0_20], %59 {strides = array<i32>} : memref<1x1x8xf32, #tpu.memory_space<vmem>>, vector<1x1x8xf32>,
    %c0_21 = arith.constant 0 : index
    %c0_22 = arith.constant 0 : index
    %c0_23 = arith.constant 0 : index
    %61 = vector.load %arg5[%c0_21, %c0_22, %c0_23] : memref<1x1x8xf32, #tpu.memory_space<vmem>>, vector<1x1x8xf32>
    %62 = vector.shape_cast %50 : vector<1x8xf32> to vector<1x1x8xf32>
    %63 = arith.addf %61, %62 : vector<1x1x8xf32>
    %c0_24 = arith.constant 0 : index
    %c0_25 = arith.constant 0 : index
    %c0_26 = arith.constant 0 : index
    %64 = vector.load %arg5[%c0_24, %c0_25, %c0_26] : memref<1x1x8xf32, #tpu.memory_space<vmem>>, vector<1x1x8xf32>
    tpu.vector_store %arg5[%c0_24, %c0_25, %c0_26], %63 {strides = array<i32>} : memref<1x1x8xf32, #tpu.memory_space<vmem>>, vector<1x1x8xf32>,
    return
  }
  func.func @transform_0(%arg0: i32, %arg1: i32) -> (i32, i32) {
    %c2_i32 = arith.constant 2 : i32
    %0 = arith.muli %arg0, %c2_i32 : i32
    %1 = arith.addi %0, %arg1 : i32
    %c3_i32 = arith.constant 3 : i32
    %2 = arith.minsi %1, %c3_i32 : i32
    %c0_i32 = arith.constant 0 : i32
    %c0_i32_0 = arith.constant 0 : i32
    return %2, %c0_i32 : i32, i32
  }
  func.func @transform_1(%arg0: i32, %arg1: i32) -> (i32, i32) {
    %c2_i32 = arith.constant 2 : i32
    %0 = arith.muli %arg0, %c2_i32 : i32
    %1 = arith.addi %0, %arg1 : i32
    %c3_i32 = arith.constant 3 : i32
    %2 = arith.minsi %1, %c3_i32 : i32
    %c0_i32 = arith.constant 0 : i32
    %c0_i32_0 = arith.constant 0 : i32
    return %2, %c0_i32 : i32, i32
  }
  func.func @transform_2(%arg0: i32, %arg1: i32) -> (i32, i32, i32) {
    %c0_i32 = arith.constant 0 : i32
    %c0_i32_0 = arith.constant 0 : i32
    %c0_i32_1 = arith.constant 0 : i32
    return %arg0, %c0_i32, %c0_i32_0 : i32, i32, i32
  }
  func.func @transform_3(%arg0: i32, %arg1: i32) -> (i32, i32, i32) {
    %c0_i32 = arith.constant 0 : i32
    %c0_i32_0 = arith.constant 0 : i32
    %c0_i32_1 = arith.constant 0 : i32
    return %arg0, %c0_i32, %c0_i32_0 : i32, i32, i32
  }
}

</mosaic_0001>

<llo_original>
// kernel: confidence_based_ce.1
$region0: #{confidence_based_ce.1}
  #allocation0 [shape = 'u32[]', space=smem, size = 0x4, offset = 0x4, fixed_abs, tag = 'smem constant byte address 0x4 - core index']
  #allocation1 [shape = 'u32[144,128]{1,0:T(1,128)}', space=vmem, size = 0x12000, scoped, tag = 'internal scratch']
  %s0 = inlined_call_operand.vmem [shape: f32[32,8], index: 0, kind: input, shape index: {}]
  %s1 = inlined_call_operand.vmem [shape: f32[32,8], index: 1, kind: input, shape index: {}]
  %s2 = inlined_call_operand.vmem [shape: f32[2,1,8], index: 2, kind: output, shape index: {0}]
  %s3 = inlined_call_operand.vmem [shape: f32[2,1,8], index: 3, kind: output, shape index: {1}]
  %4 = xla_tuple %s2, %s3
  %s5 = sld [smem:[#allocation0]]
  $region53: #{confidence_based_ce.1} parent=0
    _
  %s7 = ssub.s32 1, %s5
  %s8 = scalar_select 0, %s7, %s5
  loop: start=0, step=1, limit=6
  $region2: #{confidence_based_ce.1} parent=0 // loop_pre_header
    _
  $region3: #{confidence_based_ce.1} parent=0 // loop_header
    %s10 = sphi 0, %s14
    %p11 = scmp.ge.s32.totalorder %s10, 6
    %s17 = sphi 0, %s29
    %s18 = sphi 0, %s25
    %s19 = sphi 0, %s17
    %s20 = sphi 0, %s18
    %s21 = sphi 0, %s19
    %s22 = sphi 0, %s20
    %s40 = sphi 0, %s42
    %s43 = sphi 0, %s40
    %s44 = sphi 0, %s43
    %s60 = sphi 0, %s44
    %s74 = sphi 0, %s76
    %s77 = sphi 0, %s74
    %s78 = sphi 0, %s77
    %s94 = sphi 0, %s78
    %s100 = sphi 0, %s102
    %s103 = sphi 0, %s100
    %s104 = sphi 0, %s103
    %s120 = sphi 0, %s104
    %s126 = sphi 0, %s128
    %s129 = sphi 0, %s126
    %s130 = sphi 0, %s129
    %s146 = sphi 0, %s130
  $region4: #{confidence_based_ce.1} parent=0 // loop_header_branch
    %13 = sbr.rel (%p11) target = $region8
  $region5: #{confidence_based_ce.1} parent=0 // loop_body
    %s15 = ssub.s32 %s10, 1
    %s16 = ssub.s32 %s10, 2
    %s23 = sadd.s32 1, %s18
    %p24 = scmp.ge.s32.totalorder %s23, 2
    %s25 = scalar_select %p24, 0, %s23
    %s26 = sadd.s32 1, %s17
    %s27 = scalar_select %p24, %s26, %s17
    %p28 = scmp.ge.s32.totalorder %s27, 2
    %s29 = scalar_select %p28, 0, %s27
    %s30 = smul.u32 %s17, 2
    %s31 = sadd.s32 %s30, %s18
    %p32 = scmp.lt.s32.totalorder %s31, 3
    %s33 = scalar_select %p32, %s31, 3
    %s34 = smul.u32 %s29, 2
    %s35 = sadd.s32 %s34, %s25
    %p36 = scmp.lt.s32.totalorder %s35, 3
    %s37 = scalar_select %p36, %s35, 3
    %s38 = ssub.s32 %s33, %s37
    %p39 = scmp.eq.s32.totalorder %s38, 0
    %s41 = sadd.s32 %s40, 1
    %s42 = scalar_select %p39, %s40, %s41
    %p45 = pneg %p39
    %p46 = scmp.eq.s32.totalorder %s10, 3
    %p47 = por %p45, %p46
    %p48 = scmp.ne.s32.totalorder %s40, %s43
    %p49 = scmp.eq.s32.totalorder %s10, 0
    %p50 = por %p48, %p49
    %p51 = scmp.ne.s32.totalorder %s40, %s43
    %p52 = scmp.eq.s32.totalorder %s15, 3
    %p53 = por %p51, %p52
    %p54 = scmp.ne.s32.totalorder %s43, %s44
    %p55 = scmp.eq.s32.totalorder %s15, 0
    %p56 = por %p54, %p55
    %p57 = scmp.ne.s32.totalorder %s43, %s44
    %p58 = scmp.eq.s32.totalorder %s16, 3
    %p59 = por %p57, %p58
    %p61 = scmp.ne.s32.totalorder %s44, %s60
    %p62 = scmp.eq.s32.totalorder %s16, 0
    %p63 = por %p61, %p62
    %s64 = smul.u32 %s17, 2
    %s65 = sadd.s32 %s64, %s18
    %p66 = scmp.lt.s32.totalorder %s65, 3
    %s67 = scalar_select %p66, %s65, 3
    %s68 = smul.u32 %s29, 2
    %s69 = sadd.s32 %s68, %s25
    %p70 = scmp.lt.s32.totalorder %s69, 3
    %s71 = scalar_select %p70, %s69, 3
    %s72 = ssub.s32 %s67, %s71
    %p73 = scmp.eq.s32.totalorder %s72, 0
    %s75 = sadd.s32 %s74, 1
    %s76 = scalar_select %p73, %s74, %s75
    %p79 = pneg %p73
    %p80 = scmp.eq.s32.totalorder %s10, 3
    %p81 = por %p79, %p80
    %p82 = scmp.ne.s32.totalorder %s74, %s77
    %p83 = scmp.eq.s32.totalorder %s10, 0
    %p84 = por %p82, %p83
    %p85 = scmp.ne.s32.totalorder %s74, %s77
    %p86 = scmp.eq.s32.totalorder %s15, 3
    %p87 = por %p85, %p86
    %p88 = scmp.ne.s32.totalorder %s77, %s78
    %p89 = scmp.eq.s32.totalorder %s15, 0
    %p90 = por %p88, %p89
    %p91 = scmp.ne.s32.totalorder %s77, %s78
    %p92 = scmp.eq.s32.totalorder %s16, 3
    %p93 = por %p91, %p92
    %p95 = scmp.ne.s32.totalorder %s78, %s94
    %p96 = scmp.eq.s32.totalorder %s16, 0
    %p97 = por %p95, %p96
    %s98 = ssub.s32 %s17, %s29
    %p99 = scmp.eq.s32.totalorder %s98, 0
    %s101 = sadd.s32 %s100, 1
    %s102 = scalar_select %p99, %s100, %s101
    %p105 = pneg %p99
    %p106 = scmp.eq.s32.totalorder %s10, 3
    %p107 = por %p105, %p106
    %p108 = scmp.ne.s32.totalorder %s100, %s103
    %p109 = scmp.eq.s32.totalorder %s10, 0
    %p110 = por %p108, %p109
    %p111 = scmp.ne.s32.totalorder %s100, %s103
    %p112 = scmp.eq.s32.totalorder %s15, 3
    %p113 = por %p111, %p112
    %p114 = scmp.ne.s32.totalorder %s103, %s104
    %p115 = scmp.eq.s32.totalorder %s15, 0
    %p116 = por %p114, %p115
    %p117 = scmp.ne.s32.totalorder %s103, %s104
    %p118 = scmp.eq.s32.totalorder %s16, 3
    %p119 = por %p117, %p118
    %p121 = scmp.ne.s32.totalorder %s104, %s120
    %p122 = scmp.eq.s32.totalorder %s16, 0
    %p123 = por %p121, %p122
    %s124 = ssub.s32 %s17, %s29
    %p125 = scmp.eq.s32.totalorder %s124, 0
    %s127 = sadd.s32 %s126, 1
    %s128 = scalar_select %p125, %s126, %s127
    %p131 = pneg %p125
    %p132 = scmp.eq.s32.totalorder %s10, 3
    %p133 = por %p131, %p132
    %p134 = scmp.ne.s32.totalorder %s126, %s129
    %p135 = scmp.eq.s32.totalorder %s10, 0
    %p136 = por %p134, %p135
    %p137 = scmp.ne.s32.totalorder %s126, %s129
    %p138 = scmp.eq.s32.totalorder %s15, 3
    %p139 = por %p137, %p138
    %p140 = scmp.ne.s32.totalorder %s129, %s130
    %p141 = scmp.eq.s32.totalorder %s15, 0
    %p142 = por %p140, %p141
    %p143 = scmp.ne.s32.totalorder %s129, %s130
    %p144 = scmp.eq.s32.totalorder %s16, 3
    %p145 = por %p143, %p144
    %p147 = scmp.ne.s32.totalorder %s130, %s146
    %p148 = scmp.eq.s32.totalorder %s16, 0
    %p149 = por %p147, %p148
    %p150 = scmp.le.s32.totalorder 1, %s10
    %p151 = scmp.lt.s32.totalorder %s10, 5
    %p152 = pnand %p150, %p151
    %p153 = pneg %p152
    // Predicated region
    $region9: #{confidence_based_ce.1} parent=5 // pred_check
      _
    $region10: #{confidence_based_ce.1} parent=5 // pred_check_branch
      %155 = sbr.rel (%p152) target = $region12
    $region11: #{confidence_based_ce.1} parent=5 // pred_region
      %s156 = ssub.s32 %s10, 1
    $region12: #{confidence_based_ce.1} parent=5 // pred_fallthru
      _
    %p157 = scmp.lt.s32.totalorder %s10, 4
    // Predicated region
    $region13: #{confidence_based_ce.1} parent=5 // pred_check
      %p158 = pneg %p157
    $region14: #{confidence_based_ce.1} parent=5 // pred_check_branch
      %160 = sbr.rel (%p158) target = $region16
    $region15: #{confidence_based_ce.1} parent=5 // pred_region
      // Predicated region
      $region17: #{confidence_based_ce.1} parent=15 // pred_check
        %p161 = pneg %p50
      $region18: #{confidence_based_ce.1} parent=15 // pred_check_branch
        %163 = sbr.rel (%p161) target = $region20
      $region19: #{confidence_based_ce.1} parent=15 // pred_region
        %s164 = smul.u32 %s17, 2
        %s165 = sadd.s32 %s164, %s18
        %p166 = scmp.lt.s32.totalorder %s165, 3
        %s167 = scalar_select %p166, %s165, 3
        %p168 = scmp.lt.s32.totalorder %s167, 3
        %s169 = scalar_select %p168, %s167, 3
        %s170 = smul.addr %s169, 8
        %s171 = scalar_lea.vmem %s0, %s170
        %s172 = smul.u32 %s17, 2
        %s173 = sadd.s32 %s172, %s18
        %p174 = scmp.lt.s32.totalorder %s173, 3
        %s175 = scalar_select %p174, %s173, 3
      $region20: #{confidence_based_ce.1} parent=15 // pred_fallthru
        _
      // Predicated region
      $region21: #{confidence_based_ce.1} parent=15 // pred_check
        %p176 = pneg %p84
      $region22: #{confidence_based_ce.1} parent=15 // pred_check_branch
        %178 = sbr.rel (%p176) target = $region24
      $region23: #{confidence_based_ce.1} parent=15 // pred_region
        %s179 = smul.u32 %s17, 2
        %s180 = sadd.s32 %s179, %s18
        %p181 = scmp.lt.s32.totalorder %s180, 3
        %s182 = scalar_select %p181, %s180, 3
        %p183 = scmp.lt.s32.totalorder %s182, 3
        %s184 = scalar_select %p183, %s182, 3
        %s185 = smul.addr %s184, 8
        %s186 = scalar_lea.vmem %s1, %s185
        %s187 = smul.u32 %s17, 2
        %s188 = sadd.s32 %s187, %s18
        %p189 = scmp.lt.s32.totalorder %s188, 3
        %s190 = scalar_select %p189, %s188, 3
      $region24: #{confidence_based_ce.1} parent=15 // pred_fallthru
        _
    $region16: #{confidence_based_ce.1} parent=5 // pred_fallthru
      _
    %p191 = scmp.le.s32.totalorder 1, %s10
    %p192 = scmp.lt.s32.totalorder %s10, 5
    %p193 = pnand %p191, %p192
    %p194 = pneg %p193
    // Predicated region
    $region25: #{confidence_based_ce.1} parent=5 // pred_check
      _
    $region26: #{confidence_based_ce.1} parent=5 // pred_check_branch
      %196 = sbr.rel (%p193) target = $region28
    $region27: #{confidence_based_ce.1} parent=5 // pred_region
      %s197 = ssub.s32 %s10, 1
      %s198 = smul.u32 %s19, 2
      %s199 = sadd.s32 %s198, %s20
      %p200 = scmp.lt.s32.totalorder %s199, 3
      %s201 = scalar_select %p200, %s199, 3
      %p202 = scmp.lt.s32.totalorder %s201, 3
      %s203 = scalar_select %p202, %s201, 3
      %s204 = smul.addr %s203, 8
      %s205 = scalar_lea.vmem %s0, %s204
      %p206 = pneg %p56
      %p207 = pneg %p53
      %s208 = smul.u32 %s19, 2
      %s209 = sadd.s32 %s208, %s20
      %p210 = scmp.lt.s32.totalorder %s209, 3
      %s211 = scalar_select %p210, %s209, 3
      %p212 = scmp.lt.s32.totalorder %s211, 3
      %s213 = scalar_select %p212, %s211, 3
      %s214 = smul.addr %s213, 8
      %s215 = scalar_lea.vmem %s1, %s214
      %p216 = pneg %p90
      %p217 = pneg %p87
      %p218 = pneg %p116
      %p219 = pneg %p113
      %p220 = scmp.lt.s32.totalorder %s19, 1
      %s221 = scalar_select %p220, %s19, 1
      %s222 = scalar_lea.vmem %s2, %s221
      %p223 = pneg %p142
      %p224 = pneg %p139
      %p225 = scmp.lt.s32.totalorder %s19, 1
      %s226 = scalar_select %p225, %s19, 1
      %s227 = scalar_lea.vmem %s3, %s226
      %s228 = smul.u32 %s19, 2
      %s229 = sadd.s32 %s228, %s20
      %p230 = scmp.lt.s32.totalorder %s229, 3
      %s231 = scalar_select %p230, %s229, 3
      %p232 = scmp.lt.s32.totalorder %s231, 3
      %s233 = scalar_select %p232, %s231, 3
      %s234 = smul.addr %s233, 8
      %s235 = scalar_lea.vmem %s0, %s234
      %s236 = smul.u32 %s19, 2
      %s237 = sadd.s32 %s236, %s20
      %p238 = scmp.lt.s32.totalorder %s237, 3
      %s239 = scalar_select %p238, %s237, 3
      %s240 = smul.u32 %s19, 2
      %s241 = sadd.s32 %s240, %s20
      %p242 = scmp.lt.s32.totalorder %s241, 3
      %s243 = scalar_select %p242, %s241, 3
      %p244 = scmp.lt.s32.totalorder %s243, 3
      %s245 = scalar_select %p244, %s243, 3
      %s246 = smul.addr %s245, 8
      %s247 = scalar_lea.vmem %s1, %s246
      %s248 = smul.u32 %s19, 2
      %s249 = sadd.s32 %s248, %s20
      %p250 = scmp.lt.s32.totalorder %s249, 3
      %s251 = scalar_select %p250, %s249, 3
      %p252 = scmp.lt.s32.totalorder %s19, 1
      %s253 = scalar_select %p252, %s19, 1
      %s254 = scalar_lea.vmem %s2, %s253
      %p255 = scmp.lt.s32.totalorder %s19, 1
      %s256 = scalar_select %p255, %s19, 1
      %s257 = scalar_lea.vmem %s3, %s256
      %p258 = scmp.eq.s32.totalorder %s20, 0
      // Predicated region
      $region29: #{confidence_based_ce.1} parent=27 // pred_check
        %p259 = pneg %p258
      $region30: #{confidence_based_ce.1} parent=27 // pred_check_branch
        %261 = sbr.rel (%p259) target = $region32
      $region31: #{confidence_based_ce.1} parent=27 // pred_region
        %vm262 = vcmask 57344
        %263 = vst.msk [vmem:[%s254] sm:$0x1] %vm262, 0.0
        %264 = vst.msk [vmem:[%s257] sm:$0x1] %vm262, 0.0
      $region32: #{confidence_based_ce.1} parent=27 // pred_fallthru
        _
      %v265 = vld [vmem:[%s235] sm:$0xff]
      %v266 = vld [vmem:[%s247] sm:$0xff]
      %s267 = smul.u32 %s19, 2
      %s268 = sadd.s32 %s267, %s20
      %v269 = vlaneseq
      %v270 = vshrl.u32 %v269, 7
      %s271 = smul.u32 %s268, 8
      %v272 = vstv %s271
      %v273 = vadd.s32 %v272, %v270
      %vm274 = vcmp.lt.s32.totalorder %v273, 32
      %v275 = vlaneseq
      %v276 = vand.u32 %v275, 127
      %vm277 = vcmask 64512
      %v278 = vsel %vm277, %v265, -inf
      %279 = vmax.xlane.f32.xlu0 %v278
      %v280 = vpop.xlane.xlu0 %279
      %vm281 = vcmp.ge.f32.partialorder %v265, %v280
      %v282 = vsel %vm281, %v276, 8
      %v283 = vsel %vm277, %v282, 2147483647
      %v284 = vand.u32 %v283, 65535
      %v285 = vshra.s32 %v283, 16
      %v286 = vcvt.s32.f32 %v284
      %v287 = vcvt.s32.f32 %v285
      %288 = vmin.xlane.f32.xlu0 %v287
      %v289 = vpop.xlane.xlu0 %288
      %vm290 = vcmp.eq.f32.partialorder %v287, %v289
      %v291 = vsel %vm290, %v286, inf
      %292 = vmin.xlane.f32.xlu0 %v291
      %v293 = vpop.xlane.xlu0 %292
      %v294 = vcvt.f32.s32 %v293
      %v295 = vcvt.f32.s32 %v289
      %v296 = vshll.u32 %v295, 16
      %v297 = vadd.s32 %v296, %v294
      %vm298 = vcmp.eq.s32.totalorder %v276, %v297
      %v299 = vsub.f32 %v265, %v280
      %v300 = vmul.f32 %v299, 1.442695
      %v301 = vpow.pop %v300
      %v302 = vsel %vm277, %v301, 0.0
      %303 = vadd.xlane.f32.xlu0 %v302
      %v304 = vpop.xlane.xlu0 %303
      %vm305 = vcmp.lt.f32.partialorder %v304, 2.0
      %vm306 = vmand %vm305, %vm274
      %v307 = vsel %vm277, %v266, -inf
      %308 = vmax.xlane.f32.xlu0 %v307
      %v309 = vpop.xlane.xlu0 %308
      %v310 = vsub.f32 %v266, %v309
      %v311 = vmul.f32 %v310, 1.442695
      %v312 = vpow.pop %v311
      %v313 = vsel %vm277, %v312, 0.0
      %314 = vadd.xlane.f32.xlu0 %v313
      %v315 = vpop.xlane.xlu0 %314
      %v316 = vlog2.pop %v315
      %v317 = vmul.f32 %v316, 0.6931472
      %v318 = vsel %vm298, %v310, 0.0
      %v319 = vsel %vm277, %v318, 0.0
      %320 = vadd.xlane.f32.xlu0 %v319
      %v321 = vpop.xlane.xlu0 %320
      %v322 = vsub.f32 %v317, %v321
      %v323 = vsel %vm306, 1, 0
      %vm324 = vcmp.eq.s32.totalorder %v323, 1
      %vm325 = vmand %vm298, %vm324
      %v326 = vsel %vm325, 1, 0
      %v327 = vcvt.s32.f32 %v326
      %v328 = vsel %vm277, %v327, 0.0
      %v329 = vrot.slane %v328, 4
      %v330 = vadd.f32 %v328, %v329
      %v331 = vrot.slane %v330, 2
      %v332 = vadd.f32 %v330, %v331
      %v333 = vrot.slane %v332, 1
      %v334 = vadd.f32 %v332, %v333
      %v335 = vsel %vm325, %v322, 0.0
      %v336 = vsel %vm277, %v335, 0.0
      %v337 = vrot.slane %v336, 4
      %v338 = vadd.f32 %v336, %v337
      %v339 = vrot.slane %v338, 2
      %v340 = vadd.f32 %v338, %v339
      %v341 = vrot.slane %v340, 1
      %v342 = vadd.f32 %v340, %v341
      %v343 = vld [vmem:[%s254] sm:$0x1]
      %v344 = vadd.f32 %v343, %v342
      %vm345 = vcmask 57344
      %346 = vst.msk [vmem:[%s254] sm:$0x1] %vm345, %v344
      %v347 = vld [vmem:[%s257] sm:$0x1]
      %v348 = vadd.f32 %v347, %v334
      %349 = vst.msk [vmem:[%s257] sm:$0x1] %vm345, %v348
      %p350 = scmp.lt.s32.totalorder %s19, 1
      %s351 = scalar_select %p350, %s19, 1
      %s352 = scalar_lea.vmem %s2, %s351
      %p353 = scmp.lt.s32.totalorder %s19, 1
      %s354 = scalar_select %p353, %s19, 1
      %s355 = scalar_lea.vmem %s3, %s354
      // Predicated region
      $region33: #{confidence_based_ce.1} parent=27 // pred_check
        %p356 = pneg %p113
      $region34: #{confidence_based_ce.1} parent=27 // pred_check_branch
        %358 = sbr.rel (%p356) target = $region36
      $region35: #{confidence_based_ce.1} parent=27 // pred_region
        _
      $region36: #{confidence_based_ce.1} parent=27 // pred_fallthru
        _
      // Predicated region
      $region37: #{confidence_based_ce.1} parent=27 // pred_check
        %p359 = pneg %p139
      $region38: #{confidence_based_ce.1} parent=27 // pred_check_branch
        %361 = sbr.rel (%p359) target = $region40
      $region39: #{confidence_based_ce.1} parent=27 // pred_region
        _
      $region40: #{confidence_based_ce.1} parent=27 // pred_fallthru
        _
    $region28: #{confidence_based_ce.1} parent=5 // pred_fallthru
      _
    %p362 = scmp.le.s32.totalorder 2, %s10
    // Predicated region
    $region41: #{confidence_based_ce.1} parent=5 // pred_check
      %p363 = pneg %p362
    $region42: #{confidence_based_ce.1} parent=5 // pred_check_branch
      %365 = sbr.rel (%p363) target = $region44
    $region43: #{confidence_based_ce.1} parent=5 // pred_region
      %s366 = ssub.s32 %s10, 2
      // Predicated region
      $region45: #{confidence_based_ce.1} parent=43 // pred_check
        %p367 = pneg %p119
      $region46: #{confidence_based_ce.1} parent=43 // pred_check_branch
        %369 = sbr.rel (%p367) target = $region48
      $region47: #{confidence_based_ce.1} parent=43 // pred_region
        %p370 = scmp.lt.s32.totalorder %s21, 1
        %s371 = scalar_select %p370, %s21, 1
        %s372 = scalar_lea.vmem %s2, %s371
      $region48: #{confidence_based_ce.1} parent=43 // pred_fallthru
        _
      // Predicated region
      $region49: #{confidence_based_ce.1} parent=43 // pred_check
        %p373 = pneg %p145
      $region50: #{confidence_based_ce.1} parent=43 // pred_check_branch
        %375 = sbr.rel (%p373) target = $region52
      $region51: #{confidence_based_ce.1} parent=43 // pred_region
        %p376 = scmp.lt.s32.totalorder %s21, 1
        %s377 = scalar_select %p376, %s21, 1
        %s378 = scalar_lea.vmem %s3, %s377
      $region52: #{confidence_based_ce.1} parent=43 // pred_fallthru
        _
    $region44: #{confidence_based_ce.1} parent=5 // pred_fallthru
      _
  $region6: #{confidence_based_ce.1} parent=0 // loop_footer
    %s14 = sadd.s32 1, %s10
  $region7: #{confidence_based_ce.1} parent=0 // loop_footer_branch
    %9 = sbr.rel target = $region3
  $region8: #{confidence_based_ce.1} parent=0 // loop_exit
    _

</llo_original>
